<compile_context>
chip_gen: v6e
topology: v6e:2x2x1
jax: 0.10.0
libtpu: 0.0.40
codegen_flags: <defaults>
</compile_context>

<pallas_src>
import jax
import jax.numpy as jnp
from jax import lax
from jax.experimental import pallas as pl
from jax.experimental.pallas import tpu as pltpu


N_HID = 10                # hidden width of Net3
ONE_ROW = N_HID           # index of the constant-1 hidden row (bias folding)
NF = 16                   # padded feature rows (sublane axis)
LANE_W = 512              # batch samples per row (lane axis), multiple of 128
ROW_GRANULE = 8           # minimum row granularity (f32 sublane tile)
TARGET_BLOCK_ROWS = 1024  # 1024 * 512 * 4B = 2 MiB per buffer


def _cdiv(a, b):
    return -(-a // b)


def _round_up(a, b):
    return _cdiv(a, b) * b


def _mlp_kernel(x_ref, w1_ref, b1_ref, w2t_ref, w3_ref, o_ref):
    # Weights are tiny; load once per grid block (VMEM -> vregs), so no
    # per-iteration scalar->vector splats hit the VALU slot.
    w1 = w1_ref[...]        # (NF, 1)  layer-1 weight column (row ONE_ROW == 0)
    b1 = b1_ref[...]        # (NF, 1)  layer-1 bias column   (row ONE_ROW == 1)
    w2t = w2t_ref[...]      # (NF, NF) w2t[k, j] = w2[j, k]; column ONE_ROW = b2
    w3 = w3_ref[...]        # (NF, 1)  layer-3 weights;       row ONE_ROW = b3

    rows = x_ref.shape[0]   # static

    @pl.loop(0, rows)
    def _(r):
        # One row == LANE_W independent samples, lane-dense.
        x_row = x_ref[pl.ds(r, 1), :]                         # (1, LANE_W)

        # Layer 1 (1 -> 10) on the VPU; broadcasting puts the 10 hidden
        # features on sublanes.  Row ONE_ROW evaluates to relu(0*x + 1) == 1,
        # the constant-one row used to fold b2 / b3 into the next layers.
        h1 = jnp.maximum(w1 * x_row + b1, 0.0)                # (NF, LANE_W)

        # Layer 2 (10 -> 10) + b2 on the MXU; b2 is folded into column ONE_ROW
        # of w2t, so no separate bias add.  f32 accumulation, exact precision.
        z2 = jnp.dot(w2t, h1,
                     preferred_element_type=jnp.float32,
                     precision=lax.Precision.HIGHEST)         # (NF, LANE_W)
        h2 = jnp.maximum(z2, 0.0)                             # row ONE_ROW == 1

        # Layer 3 (10 -> 1) + b3 (folded into w3 row ONE_ROW): VPU multiply +
        # XLU sublane reduction.
        out = jnp.sum(h2 * w3, axis=0, keepdims=True)         # (1, LANE_W)
        o_ref[pl.ds(r, 1), :] = out


def net3_forward(x, w1, b1, w2, b2, w3, b3):
    """x: (N, 1) f32.  w* stored as (in, out), b* as (out,)-shaped (any rank).

    Returns (N, 1) f32 with the same semantics as the PyTorch Net3 forward.
    """
    n = x.shape[0]

    w1f = jnp.asarray(w1, jnp.float32).reshape(N_HID)
    b1f = jnp.asarray(b1, jnp.float32).reshape(N_HID)
    w2m = jnp.asarray(w2, jnp.float32).reshape(N_HID, N_HID)   # [in j, out k]
    b2f = jnp.asarray(b2, jnp.float32).reshape(N_HID)
    w3f = jnp.asarray(w3, jnp.float32).reshape(N_HID)
    b3s = jnp.asarray(b3, jnp.float32).reshape(())

    # Pad the feature dim to NF=16 and fold b2/b3 through a constant-1 row.
    w1c = jnp.zeros((NF, 1), jnp.float32).at[:N_HID, 0].set(w1f)
    b1c = (jnp.zeros((NF, 1), jnp.float32)
           .at[:N_HID, 0].set(b1f)
           .at[ONE_ROW, 0].set(1.0))                 # h1[ONE_ROW] == 1
    w2t = (jnp.zeros((NF, NF), jnp.float32)
           .at[:N_HID, :N_HID].set(w2m.T)            # w2t[k, j] = w2[j, k]
           .at[:N_HID, ONE_ROW].set(b2f)             # + b2 via the ones row
           .at[ONE_ROW, ONE_ROW].set(1.0))           # keep ones row alive
    w3c = (jnp.zeros((NF, 1), jnp.float32)
           .at[:N_HID, 0].set(w3f)
           .at[ONE_ROW, 0].set(b3s))                 # + b3 via the ones row

    # Lane-dense batch layout: (rows, LANE_W); pad only to an 8-row granule
    # (4096 samples), not to a whole block.
    granule = ROW_GRANULE * LANE_W
    n_pad = _round_up(n, granule)
    total_rows = n_pad // LANE_W                     # multiple of 8

    num_blocks = max(1, _cdiv(total_rows, TARGET_BLOCK_ROWS))
    if num_blocks < 2 and total_rows >= 2 * ROW_GRANULE:
        num_blocks = 2                               # >= 2 blocks for v7x's 2 TCs
    block_rows = _round_up(_cdiv(total_rows, num_blocks), ROW_GRANULE)
    padded_rows = num_blocks * block_rows

    xf = jnp.pad(jnp.asarray(x, jnp.float32).reshape(-1),
                 (0, padded_rows * LANE_W - n))
    x2 = xf.reshape(padded_rows, LANE_W)

    slab_spec = pl.BlockSpec((block_rows, LANE_W), lambda i: (i, 0))
    col_spec = pl.BlockSpec((NF, 1), lambda i: (0, 0))
    mat_spec = pl.BlockSpec((NF, NF), lambda i: (0, 0))

    out2 = pl.pallas_call(
        _mlp_kernel,
        out_shape=jax.ShapeDtypeStruct((padded_rows, LANE_W), jnp.float32),
        grid=(num_blocks,),
        in_specs=[slab_spec, col_spec, col_spec, mat_spec, col_spec],
        out_specs=slab_spec,
        compiler_params=pltpu.CompilerParams(
            dimension_semantics=("parallel",),
            vmem_limit_bytes=32 * 1024 * 1024,
        ),
    )(x2, w1c, b1c, w2t, w3c)

    return out2.reshape(-1)[:n].reshape(n, 1)


def init_params(key):
    """Deterministic parameter init mirroring nn.Linear shapes.

    PyTorch nn.Linear(in, out) has weight (out, in); we store the transpose
    (in, out) so the math is x @ W, identical up to parameterization.
    """
    ks = jax.random.split(key, 6)

    def uinit(k, shape, fan_in):
        bound = 1.0 / jnp.sqrt(fan_in)
        return jax.random.uniform(k, shape, jnp.float32, -bound, bound)

    w1 = uinit(ks[0], (1, 10), 1.0)
    b1 = uinit(ks[1], (1, 10), 1.0)
    w2 = uinit(ks[2], (10, 10), 10.0)
    b2 = uinit(ks[3], (1, 10), 10.0)
    w3 = uinit(ks[4], (10, 1), 10.0)
    b3 = uinit(ks[5], (1, 1), 10.0)
    return w1, b1, w2, b2, w3, b3


def net3_reference(x, w1, b1, w2, b2, w3, b3):
    pp = lax.Precision.HIGHEST
    h1 = jnp.maximum(jnp.dot(x, w1, precision=pp) + b1, 0.0)
    h2 = jnp.maximum(jnp.dot(h1, w2, precision=pp) + b2, 0.0)
    return jnp.dot(h2, w3, precision=pp) + b3


if __name__ == "__main__":
    key = jax.random.PRNGKey(0)
    k_x, k_x2, k_p = jax.random.split(key, 3)
    params = init_params(k_p)

    # Small case matching the original script (x = randn(100, 1)): 1 block.
    N = 100
    x = jax.random.normal(k_x, (N, 1), dtype=jnp.float32)
    out = jax.block_until_ready(net3_forward(x, *params))
    ref = net3_reference(x, *params)
    assert out.shape == (N, 1)
    assert jnp.allclose(out, ref, atol=1e-5, rtol=1e-4), \
        float(jnp.max(jnp.abs(out - ref)))

    # Moderate, non-granule-multiple case: exercises a 2-block grid, the
    # multi-row inner loop, and the padding/slicing path.
    N2 = 6000
    x2 = jax.random.normal(k_x2, (N2, 1), dtype=jnp.float32)
    out2 = jax.block_until_ready(net3_forward(x2, *params))
    ref2 = net3_reference(x2, *params)
    assert out2.shape == (N2, 1)
    assert jnp.allclose(out2, ref2, atol=1e-5, rtol=1e-4), \
        float(jnp.max(jnp.abs(out2 - ref2)))

    print("KERNEL_OK")
</pallas_src>

<mosaic_0001>
module attributes {stable_mosaic.version = 11 : i64} {
  func.func @_mlp_kernel(%arg0: i32, %arg1: memref<8x512xf32, #tpu.memory_space<vmem>>, %arg2: memref<16x1xf32, #tpu.memory_space<vmem>>, %arg3: memref<16x1xf32, #tpu.memory_space<vmem>>, %arg4: memref<16x16xf32, #tpu.memory_space<vmem>>, %arg5: memref<16x1xf32, #tpu.memory_space<vmem>>, %arg6: memref<8x512xf32, #tpu.memory_space<vmem>>) attributes {dimension_semantics = [#tpu.dimension_semantics<parallel>], iteration_bounds = array<i64: 1>, scalar_prefetch = 0 : i64, scratch_operands = 0 : i64, tpu.core_type = #tpu.core_type<tc>, window_params = [{transform_indices = @transform_0, window_bounds = array<i64: 8, 512>}, {pipeline_mode = #tpu.pipeline_mode<synchronous>, transform_indices = @transform_1, window_bounds = array<i64: 16, 1>}, {pipeline_mode = #tpu.pipeline_mode<synchronous>, transform_indices = @transform_2, window_bounds = array<i64: 16, 1>}, {pipeline_mode = #tpu.pipeline_mode<synchronous>, transform_indices = @transform_3, window_bounds = array<i64: 16, 16>}, {pipeline_mode = #tpu.pipeline_mode<synchronous>, transform_indices = @transform_4, window_bounds = array<i64: 16, 1>}, {transform_indices = @transform_5, window_bounds = array<i64: 8, 512>}]} {
    %c0 = arith.constant 0 : index
    %c0_0 = arith.constant 0 : index
    %0 = vector.load %arg2[%c0, %c0_0] : memref<16x1xf32, #tpu.memory_space<vmem>>, vector<16x1xf32>
    %c0_1 = arith.constant 0 : index
    %c0_2 = arith.constant 0 : index
    %1 = vector.load %arg3[%c0_1, %c0_2] : memref<16x1xf32, #tpu.memory_space<vmem>>, vector<16x1xf32>
    %c0_3 = arith.constant 0 : index
    %c0_4 = arith.constant 0 : index
    %2 = vector.load %arg4[%c0_3, %c0_4] : memref<16x16xf32, #tpu.memory_space<vmem>>, vector<16x16xf32>
    %c0_5 = arith.constant 0 : index
    %c0_6 = arith.constant 0 : index
    %3 = vector.load %arg5[%c0_5, %c0_6] : memref<16x1xf32, #tpu.memory_space<vmem>>, vector<16x1xf32>
    %c0_i32 = arith.constant 0 : i32
    %c8_i32 = arith.constant 8 : i32
    %4 = arith.addi %c0_i32, %c8_i32 : i32
    %c1_i32 = arith.constant 1 : i32
    scf.for %arg7 = %c0_i32 to %4 step %c1_i32  : i32 {
      %c1_i32_8 = arith.constant 1 : i32
      %5 = arith.muli %arg7, %c1_i32_8 : i32
      %c0_i32_9 = arith.constant 0 : i32
      %6 = arith.addi %c0_i32_9, %5 : i32
      %7 = arith.index_cast %6 : i32 to index
      %c0_10 = arith.constant 0 : index
      %8 = vector.load %arg1[%7, %c0_10] : memref<8x512xf32, #tpu.memory_space<vmem>>, vector<1x512xf32>
      %9 = vector.broadcast %0 : vector<16x1xf32> to vector<16x512xf32>
      %10 = vector.broadcast %8 : vector<1x512xf32> to vector<16x512xf32>
      %11 = arith.mulf %9, %10 : vector<16x512xf32>
      %12 = vector.broadcast %1 : vector<16x1xf32> to vector<16x512xf32>
      %13 = arith.addf %11, %12 : vector<16x512xf32>
      %cst = arith.constant 0.000000e+00 : f32
      %14 = vector.broadcast %cst : f32 to vector<16x512xf32>
      %15 = arith.maximumf %13, %14 : vector<16x512xf32>
      %cst_11 = arith.constant dense<0.000000e+00> : vector<16x512xf32>
      %16 = tpu.matmul %2, %15, %cst_11 {dimension_numbers = #tpu.dot_dimension_numbers<[1], [0], [0], [1], [0, 0, 1, 1], [], []>, precision = #tpu.contract_precision<fp32>} : vector<16x16xf32>, vector<16x512xf32>, vector<16x512xf32> -> vector<16x512xf32>
      %cst_12 = arith.constant 0.000000e+00 : f32
      %17 = vector.broadcast %cst_12 : f32 to vector<16x512xf32>
      %18 = arith.maximumf %16, %17 : vector<16x512xf32>
      %19 = vector.broadcast %3 : vector<16x1xf32> to vector<16x512xf32>
      %20 = arith.mulf %18, %19 : vector<16x512xf32>
      %cst_13 = arith.constant dense<0.000000e+00> : vector<512xf32>
      %21 = vector.multi_reduction <add>, %20, %cst_13 [0] : vector<16x512xf32> to vector<512xf32>
      %22 = vector.shape_cast %21 : vector<512xf32> to vector<1x512xf32>
      %23 = arith.index_cast %6 : i32 to index
      %c0_14 = arith.constant 0 : index
      %24 = vector.load %arg6[%23, %c0_14] : memref<8x512xf32, #tpu.memory_space<vmem>>, vector<1x512xf32>
      tpu.vector_store %arg6[%23, %c0_14], %22 {strides = array<i32>} : memref<8x512xf32, #tpu.memory_space<vmem>>, vector<1x512xf32>,
    }
    %c8_i32_7 = arith.constant 8 : i32
    return
  }
  func.func @transform_0(%arg0: i32) -> (i32, i32) {
    %c0_i32 = arith.constant 0 : i32
    %c0_i32_0 = arith.constant 0 : i32
    return %arg0, %c0_i32 : i32, i32
  }
  func.func @transform_1(%arg0: i32) -> (i32, i32) {
    %c0_i32 = arith.constant 0 : i32
    %c0_i32_0 = arith.constant 0 : i32
    %c0_i32_1 = arith.constant 0 : i32
    return %c0_i32, %c0_i32_0 : i32, i32
  }
  func.func @transform_2(%arg0: i32) -> (i32, i32) {
    %c0_i32 = arith.constant 0 : i32
    %c0_i32_0 = arith.constant 0 : i32
    %c0_i32_1 = arith.constant 0 : i32
    return %c0_i32, %c0_i32_0 : i32, i32
  }
  func.func @transform_3(%arg0: i32) -> (i32, i32) {
    %c0_i32 = arith.constant 0 : i32
    %c0_i32_0 = arith.constant 0 : i32
    %c0_i32_1 = arith.constant 0 : i32
    return %c0_i32, %c0_i32_0 : i32, i32
  }
  func.func @transform_4(%arg0: i32) -> (i32, i32) {
    %c0_i32 = arith.constant 0 : i32
    %c0_i32_0 = arith.constant 0 : i32
    %c0_i32_1 = arith.constant 0 : i32
    return %c0_i32, %c0_i32_0 : i32, i32
  }
  func.func @transform_5(%arg0: i32) -> (i32, i32) {
    %c0_i32 = arith.constant 0 : i32
    %c0_i32_0 = arith.constant 0 : i32
    return %arg0, %c0_i32 : i32, i32
  }
}

</mosaic_0001>

<llo_original>
// kernel: tpu_custom_call.1
$region0: #{tpu_custom_call.1}
  #allocation0 [shape = 'u32[]', space=smem, size = 0x4, offset = 0x4, fixed_abs, tag = 'smem constant byte address 0x4 - core index']
  #allocation1 [shape = 'u32[144,128]{1,0:T(1,128)}', space=vmem, size = 0x12000, scoped, tag = 'internal scratch']
  %s0 = inlined_call_operand.vmem [shape: f32[8,512], index: 0, kind: input, shape index: {}]
  %s1 = inlined_call_operand.vmem [shape: f32[16,1], index: 1, kind: input, shape index: {}]
  %s2 = inlined_call_operand.vmem [shape: f32[16,1], index: 2, kind: input, shape index: {}]
  %s3 = inlined_call_operand.vmem [shape: f32[16,16], index: 3, kind: input, shape index: {}]
  %s4 = inlined_call_operand.vmem [shape: f32[16,1], index: 4, kind: input, shape index: {}]
  %s5 = inlined_call_operand.hbm [shape: f32[8,512], index: 5, kind: output, shape index: {}]
  %s6 = sld [smem:[#allocation0]]
  $region37: #{tpu_custom_call.1} parent=0
    _
  %s8 = ssub.s32 1, %s6
  %s9 = scalar_select 0, %s8, %s6
  $region1: #{tpu_custom_call.1} parent=0
    #allocation2 [shape = 'u8[16384]{0}', space=vmem, size = 0x4000, scoped, tag = 'output window, operand 0, single buffered']
    #allocation3 [shape = 's32[1]{0}', space=sflag, size = 0x4, scoped, tag = 'scoped memory for tpu_custom_call.1']
    %10 = vsyncpa [#allocation3], 0
    // Predicated region
    $region2: #{tpu_custom_call.1} parent=1 // pred_check
      _
    $region3: #{tpu_custom_call.1} parent=1 // pred_check_branch
      %12 = sbr.rel (0) target = $region5
    $region4: #{tpu_custom_call.1} parent=1 // pred_region
      _
    $region5: #{tpu_custom_call.1} parent=1 // pred_fallthru
      _
    // Predicated region
    $region6: #{tpu_custom_call.1} parent=1 // pred_check
      _
    $region7: #{tpu_custom_call.1} parent=1 // pred_check_branch
      %14 = sbr.rel (0) target = $region9
    $region8: #{tpu_custom_call.1} parent=1 // pred_region
      _
    $region9: #{tpu_custom_call.1} parent=1 // pred_fallthru
      _
    // Predicated region
    $region10: #{tpu_custom_call.1} parent=1 // pred_check
      _
    $region11: #{tpu_custom_call.1} parent=1 // pred_check_branch
      %16 = sbr.rel (0) target = $region13
    $region12: #{tpu_custom_call.1} parent=1 // pred_region
      _
    $region13: #{tpu_custom_call.1} parent=1 // pred_fallthru
      _
    // Predicated region
    $region14: #{tpu_custom_call.1} parent=1 // pred_check
      _
    $region15: #{tpu_custom_call.1} parent=1 // pred_check_branch
      %18 = sbr.rel (0) target = $region17
    $region16: #{tpu_custom_call.1} parent=1 // pred_region
      _
    $region17: #{tpu_custom_call.1} parent=1 // pred_fallthru
      _
    // Predicated region
    $region18: #{tpu_custom_call.1} parent=1 // pred_check
      _
    $region19: #{tpu_custom_call.1} parent=1 // pred_check_branch
      %20 = sbr.rel (0) target = $region21
    $region20: #{tpu_custom_call.1} parent=1 // pred_region
      _
    $region21: #{tpu_custom_call.1} parent=1 // pred_fallthru
      _
    %v21 = vld [vmem:[%s1] sm:$0xff]
    %v22 = vld [vmem:[%s1 + $0x8] sm:$0xff]
    %v23 = vld [vmem:[%s2] sm:$0xff]
    %v24 = vld [vmem:[%s2 + $0x8] sm:$0xff]
    %v25 = vld [vmem:[%s3] sm:$0xff]
    %v26 = vld [vmem:[%s3 + $0x8] sm:$0xff]
    %v27 = vld [vmem:[%s4] sm:$0xff]
    %v28 = vld [vmem:[%s4 + $0x8] sm:$0xff]
    loop: start=0, step=1, limit=8
    $region22: #{tpu_custom_call.1} parent=1 // loop_pre_header
      _
    $region23: #{tpu_custom_call.1} parent=1 // loop_header
      %s30 = sphi 0, %s34
      %p31 = scmp.ge.s32.totalorder %s30, 8
    $region24: #{tpu_custom_call.1} parent=1 // loop_header_branch
      %33 = sbr.rel (%p31) target = $region28
    $region25: #{tpu_custom_call.1} parent=1 // loop_body
      %s35 = sshra.s32 %s30, 3
      %s36 = sand.u32 %s30, 7
      %s37 = sshra.s32 %s30, 3
      %s38 = sand.u32 %s30, 7
      %s39 = smul.u32 %s35, 4
      %s40 = smul.u32 %s39, 8
      %s41 = sadd.s32 %s40, %s38
      %s42 = scalar_lea.vmem %s0, %s41
      %v43 = vld [vmem:[%s42] ss:$8 sm:$0xf]
      %45 = vset.pattern.permute.xlu0 0
      %46 = vperm.xlu0 %45, %v21
      %v47 = vpop.permute.xlu0 %46
      %50 = vset.pattern.permute.xlu0 0
      %51 = vperm.xlu0 %50, %v22
      %v52 = vpop.permute.xlu0 %51
      %v55 = vlaneseq
      %v56 = vshrl.u32 %v55, 7
      %v57 = vsub.s32 0, %v56
      %v58 = vrot.slane %v43, %v57
      %v59 = vlaneseq
      %v60 = vshrl.u32 %v59, 7
      %v61 = vsub.s32 1, %v60
      %v62 = vrot.slane %v43, %v61
      %v63 = vlaneseq
      %v64 = vshrl.u32 %v63, 7
      %v65 = vsub.s32 2, %v64
      %v66 = vrot.slane %v43, %v65
      %v67 = vlaneseq
      %v68 = vshrl.u32 %v67, 7
      %v69 = vsub.s32 3, %v68
      %v70 = vrot.slane %v43, %v69
      %v75 = vmul.f32 %v47, %v58
      %v76 = vmul.f32 %v47, %v62
      %v77 = vmul.f32 %v47, %v66
      %v78 = vmul.f32 %v47, %v70
      %v79 = vmul.f32 %v52, %v58
      %v80 = vmul.f32 %v52, %v62
      %v81 = vmul.f32 %v52, %v66
      %v82 = vmul.f32 %v52, %v70
      %84 = vset.pattern.permute.xlu0 0
      %85 = vperm.xlu0 %84, %v23
      %v86 = vpop.permute.xlu0 %85
      %89 = vset.pattern.permute.xlu0 0
      %90 = vperm.xlu0 %89, %v24
      %v91 = vpop.permute.xlu0 %90
      %v93 = vadd.f32 %v75, %v86
      %v94 = vadd.f32 %v76, %v86
      %v95 = vadd.f32 %v77, %v86
      %v96 = vadd.f32 %v78, %v86
      %v97 = vadd.f32 %v79, %v91
      %v98 = vadd.f32 %v80, %v91
      %v99 = vadd.f32 %v81, %v91
      %v100 = vadd.f32 %v82, %v91
      %v101 = vmax.f32 %v93, 0.0
      %v102 = vmax.f32 %v94, 0.0
      %v103 = vmax.f32 %v95, 0.0
      %v104 = vmax.f32 %v96, 0.0
      %v105 = vmax.f32 %v97, 0.0
      %v106 = vmax.f32 %v98, 0.0
      %v107 = vmax.f32 %v99, 0.0
      %v108 = vmax.f32 %v100, 0.0
      %vm109 = vcmask 130048
      %v111 = vsel %vm109, %v25, 0
      %v114 = vsel %vm109, %v26, 0
      %116 = vmatprep.subr.mxu0 0.0
      %117 = vmatpush1.msra.mxu0 0.0
      %118 = vmatprep.subr.mxu0 0.0
      %119 = vmatpush1.msra.mxu0 0.0
      %120 = vmatprep.subr.mxu0 0.0
      %121 = vmatpush1.msra.mxu0 0.0
      %122 = vmatprep.subr.mxu0 0.0
      %123 = vmatpush1.msra.mxu0 0.0
      %124 = vmatprep.subr.mxu0 0.0
      %125 = vmatpush1.msra.mxu0 0.0
      %126 = vmatprep.subr.mxu0 0.0
      %127 = vmatpush1.msra.mxu0 0.0
      %128 = vmatprep.subr.mxu0 0.0
      %129 = vmatpush1.msra.mxu0 0.0
      %130 = vmatprep.subr.mxu0 0.0
      %131 = vmatpush1.msra.mxu0 0.0
      %132 = vmatprep.subr.mxu0 0.0
      %133 = vmatpush1.msra.mxu0 0.0
      %134 = vmatprep.subr.mxu0 0.0
      %135 = vmatpush1.msra.mxu0 0.0
      %136 = vmatprep.subr.mxu0 0.0
      %137 = vmatpush1.msra.mxu0 0.0
      %138 = vmatprep.subr.mxu0 0.0
      %139 = vmatpush1.msra.mxu0 0.0
      %140 = vmatprep.subr.mxu0 0.0
      %141 = vmatpush1.msra.mxu0 0.0
      %142 = vmatprep.subr.mxu0 0.0
      %143 = vmatpush1.msra.mxu0 0.0
      %v144 = vand.u32 %v106, 4294901760
      %145 = vmatprep.subr.mxu0 %v144
      %v146 = vand.u32 %v105, 4294901760
      %147 = vmatpush1.msra.mxu0 %v146
      %v148 = vand.u32 %v102, 4294901760
      %149 = vmatprep.subr.mxu0 %v148
      %v150 = vand.u32 %v101, 4294901760
      %151 = vmatpush1.msra.mxu0 %v150
      %152 = vmatprep.subr.mxu0 0.0
      %153 = vmatpush2.msra.mxu0 0.0
      %154 = vmatprep.subr.mxu0 0.0
      %155 = vmatpush2.msra.mxu0 0.0
      %156 = vmatprep.subr.mxu0 0.0
      %157 = vmatpush2.msra.mxu0 0.0
      %158 = vmatprep.subr.mxu0 0.0
      %159 = vmatpush2.msra.mxu0 0.0
      %160 = vmatprep.subr.mxu0 0.0
      %161 = vmatpush2.msra.mxu0 0.0
      %162 = vmatprep.subr.mxu0 0.0
      %163 = vmatpush2.msra.mxu0 0.0
      %164 = vmatprep.subr.mxu0 0.0
      %165 = vmatpush2.msra.mxu0 0.0
      %166 = vmatprep.subr.mxu0 0.0
      %167 = vmatpush2.msra.mxu0 0.0
      %168 = vmatprep.subr.mxu0 0.0
      %169 = vmatpush2.msra.mxu0 0.0
      %170 = vmatprep.subr.mxu0 0.0
      %171 = vmatpush2.msra.mxu0 0.0
      %172 = vmatprep.subr.mxu0 0.0
      %173 = vmatpush2.msra.mxu0 0.0
      %174 = vmatprep.subr.mxu0 0.0
      %175 = vmatpush2.msra.mxu0 0.0
      %176 = vmatprep.subr.mxu0 0.0
      %177 = vmatpush2.msra.mxu0 0.0
      %178 = vmatprep.subr.mxu0 0.0
      %179 = vmatpush2.msra.mxu0 0.0
      %180 = vmatprep.subr.mxu0 0.0
      %181 = vmatpush2.msra.mxu0 0.0
      %182 = vmatprep.subr.mxu0 0.0
      %183 = vmatpush2.msra.mxu0 0.0
      %184 = vmatprep.mubr.f32.mxu0 0.0
      %v185 = vand.u32 %v111, 4294901760
      %v186 = vsub.f32 %v111, %v185
      %v187 = vand.u32 %v186, 4294901760
      %v188 = vsub.f32 %v186, %v187
      %v189 = vand.u32 %v188, 4294901760
      %190 = vmatmul.mubr.f32.gmra.mxu0 %v189
      %v191 = vpop.f32.mrf.mxu0
      %v192 = vadd.f32 0.0, %v191
      %v193 = vpop.f32.mrf.mxu0
      %v194 = vadd.f32 0.0, %v193
      %195 = vmatprep.mubr.f32.mxu0 0.0
      %v196 = vand.u32 %v114, 4294901760
      %v197 = vsub.f32 %v114, %v196
      %v198 = vand.u32 %v197, 4294901760
      %v199 = vsub.f32 %v197, %v198
      %v200 = vand.u32 %v199, 4294901760
      %201 = vmatmul.mubr.f32.gmra.mxu0 %v200
      %v202 = vpop.f32.mrf.mxu0
      %v203 = vadd.f32 0.0, %v202
      %v204 = vpop.f32.mrf.mxu0
      %v205 = vadd.f32 0.0, %v204
      %206 = vdwg.mxu0
      %207 = vmatprep.subr.mxu0 0.0
      %208 = vmatpush1.msra.mxu0 0.0
      %209 = vmatprep.subr.mxu0 0.0
      %210 = vmatpush1.msra.mxu0 0.0
      %211 = vmatprep.subr.mxu0 0.0
      %212 = vmatpush1.msra.mxu0 0.0
      %213 = vmatprep.subr.mxu0 0.0
      %214 = vmatpush1.msra.mxu0 0.0
      %215 = vmatprep.subr.mxu0 0.0
      %216 = vmatpush1.msra.mxu0 0.0
      %217 = vmatprep.subr.mxu0 0.0
      %218 = vmatpush1.msra.mxu0 0.0
      %219 = vmatprep.subr.mxu0 0.0
      %220 = vmatpush1.msra.mxu0 0.0
      %221 = vmatprep.subr.mxu0 0.0
      %222 = vmatpush1.msra.mxu0 0.0
      %223 = vmatprep.subr.mxu0 0.0
      %224 = vmatpush1.msra.mxu0 0.0
      %225 = vmatprep.subr.mxu0 0.0
      %226 = vmatpush1.msra.mxu0 0.0
      %227 = vmatprep.subr.mxu0 0.0
      %228 = vmatpush1.msra.mxu0 0.0
      %229 = vmatprep.subr.mxu0 0.0
      %230 = vmatpush1.msra.mxu0 0.0
      %231 = vmatprep.subr.mxu0 0.0
      %232 = vmatpush1.msra.mxu0 0.0
      %233 = vmatprep.subr.mxu0 0.0
      %234 = vmatpush1.msra.mxu0 0.0
      %v235 = vand.u32 %v106, 4294901760
      %v236 = vsub.f32 %v106, %v235
      %v237 = vand.u32 %v236, 4294901760
      %v238 = vsub.f32 %v236, %v237
      %v239 = vand.u32 %v238, 4294901760
      %240 = vmatprep.subr.mxu0 %v239
      %v241 = vand.u32 %v105, 4294901760
      %v242 = vsub.f32 %v105, %v241
      %v243 = vand.u32 %v242, 4294901760
      %v244 = vsub.f32 %v242, %v243
      %v245 = vand.u32 %v244, 4294901760
      %246 = vmatpush1.msra.mxu0 %v245
      %v247 = vand.u32 %v102, 4294901760
      %v248 = vsub.f32 %v102, %v247
      %v249 = vand.u32 %v248, 4294901760
      %v250 = vsub.f32 %v248, %v249
      %v251 = vand.u32 %v250, 4294901760
      %252 = vmatprep.subr.mxu0 %v251
      %v253 = vand.u32 %v101, 4294901760
      %v254 = vsub.f32 %v101, %v253
      %v255 = vand.u32 %v254, 4294901760
      %v256 = vsub.f32 %v254, %v255
      %v257 = vand.u32 %v256, 4294901760
      %258 = vmatpush1.msra.mxu0 %v257
      %259 = vmatprep.subr.mxu0 0.0
      %260 = vmatpush2.msra.mxu0 0.0
      %261 = vmatprep.subr.mxu0 0.0
      %262 = vmatpush2.msra.mxu0 0.0
      %263 = vmatprep.subr.mxu0 0.0
      %264 = vmatpush2.msra.mxu0 0.0
      %265 = vmatprep.subr.mxu0 0.0
      %266 = vmatpush2.msra.mxu0 0.0
      %267 = vmatprep.subr.mxu0 0.0
      %268 = vmatpush2.msra.mxu0 0.0
      %269 = vmatprep.subr.mxu0 0.0
      %270 = vmatpush2.msra.mxu0 0.0
      %271 = vmatprep.subr.mxu0 0.0
      %272 = vmatpush2.msra.mxu0 0.0
      %273 = vmatprep.subr.mxu0 0.0
      %274 = vmatpush2.msra.mxu0 0.0
      %275 = vmatprep.subr.mxu0 0.0
      %276 = vmatpush2.msra.mxu0 0.0
      %277 = vmatprep.subr.mxu0 0.0
      %278 = vmatpush2.msra.mxu0 0.0
      %279 = vmatprep.subr.mxu0 0.0
      %280 = vmatpush2.msra.mxu0 0.0
      %281 = vmatprep.subr.mxu0 0.0
      %282 = vmatpush2.msra.mxu0 0.0
      %283 = vmatprep.subr.mxu0 0.0
      %284 = vmatpush2.msra.mxu0 0.0
      %285 = vmatprep.subr.mxu0 0.0
      %286 = vmatpush2.msra.mxu0 0.0
      %287 = vmatprep.subr.mxu0 0.0
      %288 = vmatpush2.msra.mxu0 0.0
      %289 = vmatprep.subr.mxu0 0.0
      %290 = vmatpush2.msra.mxu0 0.0
      %291 = vmatprep.mubr.f32.mxu0 0.0
      %v292 = vand.u32 %v111, 4294901760
      %293 = vmatmul.mubr.f32.gmra.mxu0 %v292
      %v294 = vpop.f32.mrf.mxu0
      %v295 = vadd.f32 %v192, %v294
      %v296 = vpop.f32.mrf.mxu0
      %v297 = vadd.f32 %v194, %v296
      %298 = vmatprep.mubr.f32.mxu0 0.0
      %v299 = vand.u32 %v114, 4294901760
      %300 = vmatmul.mubr.f32.gmra.mxu0 %v299
      %v301 = vpop.f32.mrf.mxu0
      %v302 = vadd.f32 %v203, %v301
      %v303 = vpop.f32.mrf.mxu0
      %v304 = vadd.f32 %v205, %v303
      %305 = vdwg.mxu0
      %306 = vmatprep.subr.mxu0 0.0
      %307 = vmatpush1.msra.mxu0 0.0
      %308 = vmatprep.subr.mxu0 0.0
      %309 = vmatpush1.msra.mxu0 0.0
      %310 = vmatprep.subr.mxu0 0.0
      %311 = vmatpush1.msra.mxu0 0.0
      %312 = vmatprep.subr.mxu0 0.0
      %313 = vmatpush1.msra.mxu0 0.0
      %314 = vmatprep.subr.mxu0 0.0
      %315 = vmatpush1.msra.mxu0 0.0
      %316 = vmatprep.subr.mxu0 0.0
      %317 = vmatpush1.msra.mxu0 0.0
      %318 = vmatprep.subr.mxu0 0.0
      %319 = vmatpush1.msra.mxu0 0.0
      %320 = vmatprep.subr.mxu0 0.0
      %321 = vmatpush1.msra.mxu0 0.0
      %322 = vmatprep.subr.mxu0 0.0
      %323 = vmatpush1.msra.mxu0 0.0
      %324 = vmatprep.subr.mxu0 0.0
      %325 = vmatpush1.msra.mxu0 0.0
      %326 = vmatprep.subr.mxu0 0.0
      %327 = vmatpush1.msra.mxu0 0.0
      %328 = vmatprep.subr.mxu0 0.0
      %329 = vmatpush1.msra.mxu0 0.0
      %330 = vmatprep.subr.mxu0 0.0
      %331 = vmatpush1.msra.mxu0 0.0
      %332 = vmatprep.subr.mxu0 0.0
      %333 = vmatpush1.msra.mxu0 0.0
      %v334 = vand.u32 %v106, 4294901760
      %v335 = vsub.f32 %v106, %v334
      %336 = vmatprep.subr.mxu0 %v335
      %v337 = vand.u32 %v105, 4294901760
      %v338 = vsub.f32 %v105, %v337
      %339 = vmatpush1.msra.mxu0 %v338
      %v340 = vand.u32 %v102, 4294901760
      %v341 = vsub.f32 %v102, %v340
      %342 = vmatprep.subr.mxu0 %v341
      %v343 = vand.u32 %v101, 4294901760
      %v344 = vsub.f32 %v101, %v343
      %345 = vmatpush1.msra.mxu0 %v344
      %346 = vmatprep.subr.mxu0 0.0
      %347 = vmatpush2.msra.mxu0 0.0
      %348 = vmatprep.subr.mxu0 0.0
      %349 = vmatpush2.msra.mxu0 0.0
      %350 = vmatprep.subr.mxu0 0.0
      %351 = vmatpush2.msra.mxu0 0.0
      %352 = vmatprep.subr.mxu0 0.0
      %353 = vmatpush2.msra.mxu0 0.0
      %354 = vmatprep.subr.mxu0 0.0
      %355 = vmatpush2.msra.mxu0 0.0
      %356 = vmatprep.subr.mxu0 0.0
      %357 = vmatpush2.msra.mxu0 0.0
      %358 = vmatprep.subr.mxu0 0.0
      %359 = vmatpush2.msra.mxu0 0.0
      %360 = vmatprep.subr.mxu0 0.0
      %361 = vmatpush2.msra.mxu0 0.0
      %362 = vmatprep.subr.mxu0 0.0
      %363 = vmatpush2.msra.mxu0 0.0
      %364 = vmatprep.subr.mxu0 0.0
      %365 = vmatpush2.msra.mxu0 0.0
      %366 = vmatprep.subr.mxu0 0.0
      %367 = vmatpush2.msra.mxu0 0.0
      %368 = vmatprep.subr.mxu0 0.0
      %369 = vmatpush2.msra.mxu0 0.0
      %370 = vmatprep.subr.mxu0 0.0
      %371 = vmatpush2.msra.mxu0 0.0
      %372 = vmatprep.subr.mxu0 0.0
      %373 = vmatpush2.msra.mxu0 0.0
      %374 = vmatprep.subr.mxu0 0.0
      %375 = vmatpush2.msra.mxu0 0.0
      %376 = vmatprep.subr.mxu0 0.0
      %377 = vmatpush2.msra.mxu0 0.0
      %378 = vmatprep.mubr.f32.mxu0 0.0
      %v379 = vand.u32 %v111, 4294901760
      %v380 = vsub.f32 %v111, %v379
      %381 = vmatmul.mubr.f32.gmra.mxu0 %v380
      %v382 = vpop.f32.mrf.mxu0
      %v383 = vadd.f32 %v295, %v382
      %v384 = vpop.f32.mrf.mxu0
      %v385 = vadd.f32 %v297, %v384
      %386 = vmatprep.mubr.f32.mxu0 0.0
      %v387 = vand.u32 %v114, 4294901760
      %v388 = vsub.f32 %v114, %v387
      %389 = vmatmul.mubr.f32.gmra.mxu0 %v388
      %v390 = vpop.f32.mrf.mxu0
      %v391 = vadd.f32 %v302, %v390
      %v392 = vpop.f32.mrf.mxu0
      %v393 = vadd.f32 %v304, %v392
      %394 = vdwg.mxu0
      %395 = vmatprep.subr.mxu0 0.0
      %396 = vmatpush1.msra.mxu0 0.0
      %397 = vmatprep.subr.mxu0 0.0
      %398 = vmatpush1.msra.mxu0 0.0
      %399 = vmatprep.subr.mxu0 0.0
      %400 = vmatpush1.msra.mxu0 0.0
      %401 = vmatprep.subr.mxu0 0.0
      %402 = vmatpush1.msra.mxu0 0.0
      %403 = vmatprep.subr.mxu0 0.0
      %404 = vmatpush1.msra.mxu0 0.0
      %405 = vmatprep.subr.mxu0 0.0
      %406 = vmatpush1.msra.mxu0 0.0
      %407 = vmatprep.subr.mxu0 0.0
      %408 = vmatpush1.msra.mxu0 0.0
      %409 = vmatprep.subr.mxu0 0.0
      %410 = vmatpush1.msra.mxu0 0.0
      %411 = vmatprep.subr.mxu0 0.0
      %412 = vmatpush1.msra.mxu0 0.0
      %413 = vmatprep.subr.mxu0 0.0
      %414 = vmatpush1.msra.mxu0 0.0
      %415 = vmatprep.subr.mxu0 0.0
      %416 = vmatpush1.msra.mxu0 0.0
      %417 = vmatprep.subr.mxu0 0.0
      %418 = vmatpush1.msra.mxu0 0.0
      %419 = vmatprep.subr.mxu0 0.0
      %420 = vmatpush1.msra.mxu0 0.0
      %421 = vmatprep.subr.mxu0 0.0
      %422 = vmatpush1.msra.mxu0 0.0
      %v423 = vand.u32 %v106, 4294901760
      %424 = vmatprep.subr.mxu0 %v423
      %v425 = vand.u32 %v105, 4294901760
      %426 = vmatpush1.msra.mxu0 %v425
      %v427 = vand.u32 %v102, 4294901760
      %428 = vmatprep.subr.mxu0 %v427
      %v429 = vand.u32 %v101, 4294901760
      %430 = vmatpush1.msra.mxu0 %v429
      %431 = vmatprep.subr.mxu0 0.0
      %432 = vmatpush2.msra.mxu0 0.0
      %433 = vmatprep.subr.mxu0 0.0
      %434 = vmatpush2.msra.mxu0 0.0
      %435 = vmatprep.subr.mxu0 0.0
      %436 = vmatpush2.msra.mxu0 0.0
      %437 = vmatprep.subr.mxu0 0.0
      %438 = vmatpush2.msra.mxu0 0.0
      %439 = vmatprep.subr.mxu0 0.0
      %440 = vmatpush2.msra.mxu0 0.0
      %441 = vmatprep.subr.mxu0 0.0
      %442 = vmatpush2.msra.mxu0 0.0
      %443 = vmatprep.subr.mxu0 0.0
      %444 = vmatpush2.msra.mxu0 0.0
      %445 = vmatprep.subr.mxu0 0.0
      %446 = vmatpush2.msra.mxu0 0.0
      %447 = vmatprep.subr.mxu0 0.0
      %448 = vmatpush2.msra.mxu0 0.0
      %449 = vmatprep.subr.mxu0 0.0
      %450 = vmatpush2.msra.mxu0 0.0
      %451 = vmatprep.subr.mxu0 0.0
      %452 = vmatpush2.msra.mxu0 0.0
      %453 = vmatprep.subr.mxu0 0.0
      %454 = vmatpush2.msra.mxu0 0.0
      %455 = vmatprep.subr.mxu0 0.0
      %456 = vmatpush2.msra.mxu0 0.0
      %457 = vmatprep.subr.mxu0 0.0
      %458 = vmatpush2.msra.mxu0 0.0
      %459 = vmatprep.subr.mxu0 0.0
      %460 = vmatpush2.msra.mxu0 0.0
      %461 = vmatprep.subr.mxu0 0.0
      %462 = vmatpush2.msra.mxu0 0.0
      %463 = vmatprep.mubr.f32.mxu0 0.0
      %v464 = vand.u32 %v111, 4294901760
      %v465 = vsub.f32 %v111, %v464
      %v466 = vand.u32 %v465, 4294901760
      %467 = vmatmul.mubr.f32.gmra.mxu0 %v466
      %v468 = vpop.f32.mrf.mxu0
      %v469 = vadd.f32 %v383, %v468
      %v470 = vpop.f32.mrf.mxu0
      %v471 = vadd.f32 %v385, %v470
      %472 = vmatprep.mubr.f32.mxu0 0.0
      %v473 = vand.u32 %v114, 4294901760
      %v474 = vsub.f32 %v114, %v473
      %v475 = vand.u32 %v474, 4294901760
      %476 = vmatmul.mubr.f32.gmra.mxu0 %v475
      %v477 = vpop.f32.mrf.mxu0
      %v478 = vadd.f32 %v391, %v477
      %v479 = vpop.f32.mrf.mxu0
      %v480 = vadd.f32 %v393, %v479
      %481 = vdwg.mxu0
      %482 = vmatprep.subr.mxu0 0.0
      %483 = vmatpush1.msra.mxu0 0.0
      %484 = vmatprep.subr.mxu0 0.0
      %485 = vmatpush1.msra.mxu0 0.0
      %486 = vmatprep.subr.mxu0 0.0
      %487 = vmatpush1.msra.mxu0 0.0
      %488 = vmatprep.subr.mxu0 0.0
      %489 = vmatpush1.msra.mxu0 0.0
      %490 = vmatprep.subr.mxu0 0.0
      %491 = vmatpush1.msra.mxu0 0.0
      %492 = vmatprep.subr.mxu0 0.0
      %493 = vmatpush1.msra.mxu0 0.0
      %494 = vmatprep.subr.mxu0 0.0
      %495 = vmatpush1.msra.mxu0 0.0
      %496 = vmatprep.subr.mxu0 0.0
      %497 = vmatpush1.msra.mxu0 0.0
      %498 = vmatprep.subr.mxu0 0.0
      %499 = vmatpush1.msra.mxu0 0.0
      %500 = vmatprep.subr.mxu0 0.0
      %501 = vmatpush1.msra.mxu0 0.0
      %502 = vmatprep.subr.mxu0 0.0
      %503 = vmatpush1.msra.mxu0 0.0
      %504 = vmatprep.subr.mxu0 0.0
      %505 = vmatpush1.msra.mxu0 0.0
      %506 = vmatprep.subr.mxu0 0.0
      %507 = vmatpush1.msra.mxu0 0.0
      %508 = vmatprep.subr.mxu0 0.0
      %509 = vmatpush1.msra.mxu0 0.0
      %v510 = vand.u32 %v106, 4294901760
      %v511 = vsub.f32 %v106, %v510
      %v512 = vand.u32 %v511, 4294901760
      %513 = vmatprep.subr.mxu0 %v512
      %v514 = vand.u32 %v105, 4294901760
      %v515 = vsub.f32 %v105, %v514
      %v516 = vand.u32 %v515, 4294901760
      %517 = vmatpush1.msra.mxu0 %v516
      %v518 = vand.u32 %v102, 4294901760
      %v519 = vsub.f32 %v102, %v518
      %v520 = vand.u32 %v519, 4294901760
      %521 = vmatprep.subr.mxu0 %v520
      %v522 = vand.u32 %v101, 4294901760
      %v523 = vsub.f32 %v101, %v522
      %v524 = vand.u32 %v523, 4294901760
      %525 = vmatpush1.msra.mxu0 %v524
      %526 = vmatprep.subr.mxu0 0.0
      %527 = vmatpush2.msra.mxu0 0.0
      %528 = vmatprep.subr.mxu0 0.0
      %529 = vmatpush2.msra.mxu0 0.0
      %530 = vmatprep.subr.mxu0 0.0
      %531 = vmatpush2.msra.mxu0 0.0
      %532 = vmatprep.subr.mxu0 0.0
      %533 = vmatpush2.msra.mxu0 0.0
      %534 = vmatprep.subr.mxu0 0.0
      %535 = vmatpush2.msra.mxu0 0.0
      %536 = vmatprep.subr.mxu0 0.0
      %537 = vmatpush2.msra.mxu0 0.0
      %538 = vmatprep.subr.mxu0 0.0
      %539 = vmatpush2.msra.mxu0 0.0
      %540 = vmatprep.subr.mxu0 0.0
      %541 = vmatpush2.msra.mxu0 0.0
      %542 = vmatprep.subr.mxu0 0.0
      %543 = vmatpush2.msra.mxu0 0.0
      %544 = vmatprep.subr.mxu0 0.0
      %545 = vmatpush2.msra.mxu0 0.0
      %546 = vmatprep.subr.mxu0 0.0
      %547 = vmatpush2.msra.mxu0 0.0
      %548 = vmatprep.subr.mxu0 0.0
      %549 = vmatpush2.msra.mxu0 0.0
      %550 = vmatprep.subr.mxu0 0.0
      %551 = vmatpush2.msra.mxu0 0.0
      %552 = vmatprep.subr.mxu0 0.0
      %553 = vmatpush2.msra.mxu0 0.0
      %554 = vmatprep.subr.mxu0 0.0
      %555 = vmatpush2.msra.mxu0 0.0
      %556 = vmatprep.subr.mxu0 0.0
      %557 = vmatpush2.msra.mxu0 0.0
      %558 = vmatprep.mubr.f32.mxu0 0.0
      %v559 = vand.u32 %v111, 4294901760
      %560 = vmatmul.mubr.f32.gmra.mxu0 %v559
      %v561 = vpop.f32.mrf.mxu0
      %v562 = vadd.f32 %v469, %v561
      %v563 = vpop.f32.mrf.mxu0
      %v564 = vadd.f32 %v471, %v563
      %565 = vmatprep.mubr.f32.mxu0 0.0
      %v566 = vand.u32 %v114, 4294901760
      %567 = vmatmul.mubr.f32.gmra.mxu0 %v566
      %v568 = vpop.f32.mrf.mxu0
      %v569 = vadd.f32 %v478, %v568
      %v570 = vpop.f32.mrf.mxu0
      %v571 = vadd.f32 %v480, %v570
      %572 = vdwg.mxu0
      %573 = vmatprep.subr.mxu0 0.0
      %574 = vmatpush1.msra.mxu0 0.0
      %575 = vmatprep.subr.mxu0 0.0
      %576 = vmatpush1.msra.mxu0 0.0
      %577 = vmatprep.subr.mxu0 0.0
      %578 = vmatpush1.msra.mxu0 0.0
      %579 = vmatprep.subr.mxu0 0.0
      %580 = vmatpush1.msra.mxu0 0.0
      %581 = vmatprep.subr.mxu0 0.0
      %582 = vmatpush1.msra.mxu0 0.0
      %583 = vmatprep.subr.mxu0 0.0
      %584 = vmatpush1.msra.mxu0 0.0
      %585 = vmatprep.subr.mxu0 0.0
      %586 = vmatpush1.msra.mxu0 0.0
      %587 = vmatprep.subr.mxu0 0.0
      %588 = vmatpush1.msra.mxu0 0.0
      %589 = vmatprep.subr.mxu0 0.0
      %590 = vmatpush1.msra.mxu0 0.0
      %591 = vmatprep.subr.mxu0 0.0
      %592 = vmatpush1.msra.mxu0 0.0
      %593 = vmatprep.subr.mxu0 0.0
      %594 = vmatpush1.msra.mxu0 0.0
      %595 = vmatprep.subr.mxu0 0.0
      %596 = vmatpush1.msra.mxu0 0.0
      %597 = vmatprep.subr.mxu0 0.0
      %598 = vmatpush1.msra.mxu0 0.0
      %599 = vmatprep.subr.mxu0 0.0
      %600 = vmatpush1.msra.mxu0 0.0
      %v601 = vand.u32 %v106, 4294901760
      %602 = vmatprep.subr.mxu0 %v601
      %v603 = vand.u32 %v105, 4294901760
      %604 = vmatpush1.msra.mxu0 %v603
      %v605 = vand.u32 %v102, 4294901760
      %606 = vmatprep.subr.mxu0 %v605
      %v607 = vand.u32 %v101, 4294901760
      %608 = vmatpush1.msra.mxu0 %v607
      %609 = vmatprep.subr.mxu0 0.0
      %610 = vmatpush2.msra.mxu0 0.0
      %611 = vmatprep.subr.mxu0 0.0
      %612 = vmatpush2.msra.mxu0 0.0
      %613 = vmatprep.subr.mxu0 0.0
      %614 = vmatpush2.msra.mxu0 0.0
      %615 = vmatprep.subr.mxu0 0.0
      %616 = vmatpush2.msra.mxu0 0.0
      %617 = vmatprep.subr.mxu0 0.0
      %618 = vmatpush2.msra.mxu0 0.0
      %619 = vmatprep.subr.mxu0 0.0
      %620 = vmatpush2.msra.mxu0 0.0
      %621 = vmatprep.subr.mxu0 0.0
      %622 = vmatpush2.msra.mxu0 0.0
      %623 = vmatprep.subr.mxu0 0.0
      %624 = vmatpush2.msra.mxu0 0.0
      %625 = vmatprep.subr.mxu0 0.0
      %626 = vmatpush2.msra.mxu0 0.0
      %627 = vmatprep.subr.mxu0 0.0
      %628 = vmatpush2.msra.mxu0 0.0
      %629 = vmatprep.subr.mxu0 0.0
      %630 = vmatpush2.msra.mxu0 0.0
      %631 = vmatprep.subr.mxu0 0.0
      %632 = vmatpush2.msra.mxu0 0.0
      %633 = vmatprep.subr.mxu0 0.0
      %634 = vmatpush2.msra.mxu0 0.0
      %635 = vmatprep.subr.mxu0 0.0
      %636 = vmatpush2.msra.mxu0 0.0
      %637 = vmatprep.subr.mxu0 0.0
      %638 = vmatpush2.msra.mxu0 0.0
      %639 = vmatprep.subr.mxu0 0.0
      %640 = vmatpush2.msra.mxu0 0.0
      %641 = vmatprep.mubr.f32.mxu0 0.0
      %v642 = vand.u32 %v111, 4294901760
      %643 = vmatmul.mubr.f32.gmra.mxu0 %v642
      %v644 = vpop.f32.mrf.mxu0
      %v645 = vadd.f32 %v562, %v644
      %v646 = vpop.f32.mrf.mxu0
      %v647 = vadd.f32 %v564, %v646
      %648 = vmatprep.mubr.f32.mxu0 0.0
      %v649 = vand.u32 %v114, 4294901760
      %650 = vmatmul.mubr.f32.gmra.mxu0 %v649
      %v651 = vpop.f32.mrf.mxu0
      %v652 = vadd.f32 %v569, %v651
      %v653 = vpop.f32.mrf.mxu0
      %v654 = vadd.f32 %v571, %v653
      %655 = vdwg.mxu0
      %656 = vmatprep.subr.mxu0 0.0
      %657 = vmatpush1.msra.mxu0 0.0
      %658 = vmatprep.subr.mxu0 0.0
      %659 = vmatpush1.msra.mxu0 0.0
      %660 = vmatprep.subr.mxu0 0.0
      %661 = vmatpush1.msra.mxu0 0.0
      %662 = vmatprep.subr.mxu0 0.0
      %663 = vmatpush1.msra.mxu0 0.0
      %664 = vmatprep.subr.mxu0 0.0
      %665 = vmatpush1.msra.mxu0 0.0
      %666 = vmatprep.subr.mxu0 0.0
      %667 = vmatpush1.msra.mxu0 0.0
      %668 = vmatprep.subr.mxu0 0.0
      %669 = vmatpush1.msra.mxu0 0.0
      %670 = vmatprep.subr.mxu0 0.0
      %671 = vmatpush1.msra.mxu0 0.0
      %672 = vmatprep.subr.mxu0 0.0
      %673 = vmatpush1.msra.mxu0 0.0
      %674 = vmatprep.subr.mxu0 0.0
      %675 = vmatpush1.msra.mxu0 0.0
      %676 = vmatprep.subr.mxu0 0.0
      %677 = vmatpush1.msra.mxu0 0.0
      %678 = vmatprep.subr.mxu0 0.0
      %679 = vmatpush1.msra.mxu0 0.0
      %680 = vmatprep.subr.mxu0 0.0
      %681 = vmatpush1.msra.mxu0 0.0
      %682 = vmatprep.subr.mxu0 0.0
      %683 = vmatpush1.msra.mxu0 0.0
      %v684 = vand.u32 %v108, 4294901760
      %685 = vmatprep.subr.mxu0 %v684
      %v686 = vand.u32 %v107, 4294901760
      %687 = vmatpush1.msra.mxu0 %v686
      %v688 = vand.u32 %v104, 4294901760
      %689 = vmatprep.subr.mxu0 %v688
      %v690 = vand.u32 %v103, 4294901760
      %691 = vmatpush1.msra.mxu0 %v690
      %692 = vmatprep.subr.mxu0 0.0
      %693 = vmatpush2.msra.mxu0 0.0
      %694 = vmatprep.subr.mxu0 0.0
      %695 = vmatpush2.msra.mxu0 0.0
      %696 = vmatprep.subr.mxu0 0.0
      %697 = vmatpush2.msra.mxu0 0.0
      %698 = vmatprep.subr.mxu0 0.0
      %699 = vmatpush2.msra.mxu0 0.0
      %700 = vmatprep.subr.mxu0 0.0
      %701 = vmatpush2.msra.mxu0 0.0
      %702 = vmatprep.subr.mxu0 0.0
      %703 = vmatpush2.msra.mxu0 0.0
      %704 = vmatprep.subr.mxu0 0.0
      %705 = vmatpush2.msra.mxu0 0.0
      %706 = vmatprep.subr.mxu0 0.0
      %707 = vmatpush2.msra.mxu0 0.0
      %708 = vmatprep.subr.mxu0 0.0
      %709 = vmatpush2.msra.mxu0 0.0
      %710 = vmatprep.subr.mxu0 0.0
      %711 = vmatpush2.msra.mxu0 0.0
      %712 = vmatprep.subr.mxu0 0.0
      %713 = vmatpush2.msra.mxu0 0.0
      %714 = vmatprep.subr.mxu0 0.0
      %715 = vmatpush2.msra.mxu0 0.0
      %716 = vmatprep.subr.mxu0 0.0
      %717 = vmatpush2.msra.mxu0 0.0
      %718 = vmatprep.subr.mxu0 0.0
      %719 = vmatpush2.msra.mxu0 0.0
      %720 = vmatprep.subr.mxu0 0.0
      %721 = vmatpush2.msra.mxu0 0.0
      %722 = vmatprep.subr.mxu0 0.0
      %723 = vmatpush2.msra.mxu0 0.0
      %724 = vmatprep.mubr.f32.mxu0 0.0
      %v725 = vand.u32 %v111, 4294901760
      %v726 = vsub.f32 %v111, %v725
      %v727 = vand.u32 %v726, 4294901760
      %v728 = vsub.f32 %v726, %v727
      %v729 = vand.u32 %v728, 4294901760
      %730 = vmatmul.mubr.f32.gmra.mxu0 %v729
      %v731 = vpop.f32.mrf.mxu0
      %v732 = vadd.f32 0.0, %v731
      %v733 = vpop.f32.mrf.mxu0
      %v734 = vadd.f32 0.0, %v733
      %735 = vmatprep.mubr.f32.mxu0 0.0
      %v736 = vand.u32 %v114, 4294901760
      %v737 = vsub.f32 %v114, %v736
      %v738 = vand.u32 %v737, 4294901760
      %v739 = vsub.f32 %v737, %v738
      %v740 = vand.u32 %v739, 4294901760
      %741 = vmatmul.mubr.f32.gmra.mxu0 %v740
      %v742 = vpop.f32.mrf.mxu0
      %v743 = vadd.f32 0.0, %v742
      %v744 = vpop.f32.mrf.mxu0
      %v745 = vadd.f32 0.0, %v744
      %746 = vdwg.mxu0
      %747 = vmatprep.subr.mxu0 0.0
      %748 = vmatpush1.msra.mxu0 0.0
      %749 = vmatprep.subr.mxu0 0.0
      %750 = vmatpush1.msra.mxu0 0.0
      %751 = vmatprep.subr.mxu0 0.0
      %752 = vmatpush1.msra.mxu0 0.0
      %753 = vmatprep.subr.mxu0 0.0
      %754 = vmatpush1.msra.mxu0 0.0
      %755 = vmatprep.subr.mxu0 0.0
      %756 = vmatpush1.msra.mxu0 0.0
      %757 = vmatprep.subr.mxu0 0.0
      %758 = vmatpush1.msra.mxu0 0.0
      %759 = vmatprep.subr.mxu0 0.0
      %760 = vmatpush1.msra.mxu0 0.0
      %761 = vmatprep.subr.mxu0 0.0
      %762 = vmatpush1.msra.mxu0 0.0
      %763 = vmatprep.subr.mxu0 0.0
      %764 = vmatpush1.msra.mxu0 0.0
      %765 = vmatprep.subr.mxu0 0.0
      %766 = vmatpush1.msra.mxu0 0.0
      %767 = vmatprep.subr.mxu0 0.0
      %768 = vmatpush1.msra.mxu0 0.0
      %769 = vmatprep.subr.mxu0 0.0
      %770 = vmatpush1.msra.mxu0 0.0
      %771 = vmatprep.subr.mxu0 0.0
      %772 = vmatpush1.msra.mxu0 0.0
      %773 = vmatprep.subr.mxu0 0.0
      %774 = vmatpush1.msra.mxu0 0.0
      %v775 = vand.u32 %v108, 4294901760
      %v776 = vsub.f32 %v108, %v775
      %v777 = vand.u32 %v776, 4294901760
      %v778 = vsub.f32 %v776, %v777
      %v779 = vand.u32 %v778, 4294901760
      %780 = vmatprep.subr.mxu0 %v779
      %v781 = vand.u32 %v107, 4294901760
      %v782 = vsub.f32 %v107, %v781
      %v783 = vand.u32 %v782, 4294901760
      %v784 = vsub.f32 %v782, %v783
      %v785 = vand.u32 %v784, 4294901760
      %786 = vmatpush1.msra.mxu0 %v785
      %v787 = vand.u32 %v104, 4294901760
      %v788 = vsub.f32 %v104, %v787
      %v789 = vand.u32 %v788, 4294901760
      %v790 = vsub.f32 %v788, %v789
      %v791 = vand.u32 %v790, 4294901760
      %792 = vmatprep.subr.mxu0 %v791
      %v793 = vand.u32 %v103, 4294901760
      %v794 = vsub.f32 %v103, %v793
      %v795 = vand.u32 %v794, 4294901760
      %v796 = vsub.f32 %v794, %v795
      %v797 = vand.u32 %v796, 4294901760
      %798 = vmatpush1.msra.mxu0 %v797
      %799 = vmatprep.subr.mxu0 0.0
      %800 = vmatpush2.msra.mxu0 0.0
      %801 = vmatprep.subr.mxu0 0.0
      %802 = vmatpush2.msra.mxu0 0.0
      %803 = vmatprep.subr.mxu0 0.0
      %804 = vmatpush2.msra.mxu0 0.0
      %805 = vmatprep.subr.mxu0 0.0
      %806 = vmatpush2.msra.mxu0 0.0
      %807 = vmatprep.subr.mxu0 0.0
      %808 = vmatpush2.msra.mxu0 0.0
      %809 = vmatprep.subr.mxu0 0.0
      %810 = vmatpush2.msra.mxu0 0.0
      %811 = vmatprep.subr.mxu0 0.0
      %812 = vmatpush2.msra.mxu0 0.0
      %813 = vmatprep.subr.mxu0 0.0
      %814 = vmatpush2.msra.mxu0 0.0
      %815 = vmatprep.subr.mxu0 0.0
      %816 = vmatpush2.msra.mxu0 0.0
      %817 = vmatprep.subr.mxu0 0.0
      %818 = vmatpush2.msra.mxu0 0.0
      %819 = vmatprep.subr.mxu0 0.0
      %820 = vmatpush2.msra.mxu0 0.0
      %821 = vmatprep.subr.mxu0 0.0
      %822 = vmatpush2.msra.mxu0 0.0
      %823 = vmatprep.subr.mxu0 0.0
      %824 = vmatpush2.msra.mxu0 0.0
      %825 = vmatprep.subr.mxu0 0.0
      %826 = vmatpush2.msra.mxu0 0.0
      %827 = vmatprep.subr.mxu0 0.0
      %828 = vmatpush2.msra.mxu0 0.0
      %829 = vmatprep.subr.mxu0 0.0
      %830 = vmatpush2.msra.mxu0 0.0
      %831 = vmatprep.mubr.f32.mxu0 0.0
      %v832 = vand.u32 %v111, 4294901760
      %833 = vmatmul.mubr.f32.gmra.mxu0 %v832
      %v834 = vpop.f32.mrf.mxu0
      %v835 = vadd.f32 %v732, %v834
      %v836 = vpop.f32.mrf.mxu0
      %v837 = vadd.f32 %v734, %v836
      %838 = vmatprep.mubr.f32.mxu0 0.0
      %v839 = vand.u32 %v114, 4294901760
      %840 = vmatmul.mubr.f32.gmra.mxu0 %v839
      %v841 = vpop.f32.mrf.mxu0
      %v842 = vadd.f32 %v743, %v841
      %v843 = vpop.f32.mrf.mxu0
      %v844 = vadd.f32 %v745, %v843
      %845 = vdwg.mxu0
      %846 = vmatprep.subr.mxu0 0.0
      %847 = vmatpush1.msra.mxu0 0.0
      %848 = vmatprep.subr.mxu0 0.0
      %849 = vmatpush1.msra.mxu0 0.0
      %850 = vmatprep.subr.mxu0 0.0
      %851 = vmatpush1.msra.mxu0 0.0
      %852 = vmatprep.subr.mxu0 0.0
      %853 = vmatpush1.msra.mxu0 0.0
      %854 = vmatprep.subr.mxu0 0.0
      %855 = vmatpush1.msra.mxu0 0.0
      %856 = vmatprep.subr.mxu0 0.0
      %857 = vmatpush1.msra.mxu0 0.0
      %858 = vmatprep.subr.mxu0 0.0
      %859 = vmatpush1.msra.mxu0 0.0
      %860 = vmatprep.subr.mxu0 0.0
      %861 = vmatpush1.msra.mxu0 0.0
      %862 = vmatprep.subr.mxu0 0.0
      %863 = vmatpush1.msra.mxu0 0.0
      %864 = vmatprep.subr.mxu0 0.0
      %865 = vmatpush1.msra.mxu0 0.0
      %866 = vmatprep.subr.mxu0 0.0
      %867 = vmatpush1.msra.mxu0 0.0
      %868 = vmatprep.subr.mxu0 0.0
      %869 = vmatpush1.msra.mxu0 0.0
      %870 = vmatprep.subr.mxu0 0.0
      %871 = vmatpush1.msra.mxu0 0.0
      %872 = vmatprep.subr.mxu0 0.0
      %873 = vmatpush1.msra.mxu0 0.0
      %v874 = vand.u32 %v108, 4294901760
      %v875 = vsub.f32 %v108, %v874
      %876 = vmatprep.subr.mxu0 %v875
      %v877 = vand.u32 %v107, 4294901760
      %v878 = vsub.f32 %v107, %v877
      %879 = vmatpush1.msra.mxu0 %v878
      %v880 = vand.u32 %v104, 4294901760
      %v881 = vsub.f32 %v104, %v880
      %882 = vmatprep.subr.mxu0 %v881
      %v883 = vand.u32 %v103, 4294901760
      %v884 = vsub.f32 %v103, %v883
      %885 = vmatpush1.msra.mxu0 %v884
      %886 = vmatprep.subr.mxu0 0.0
      %887 = vmatpush2.msra.mxu0 0.0
      %888 = vmatprep.subr.mxu0 0.0
      %889 = vmatpush2.msra.mxu0 0.0
      %890 = vmatprep.subr.mxu0 0.0
      %891 = vmatpush2.msra.mxu0 0.0
      %892 = vmatprep.subr.mxu0 0.0
      %893 = vmatpush2.msra.mxu0 0.0
      %894 = vmatprep.subr.mxu0 0.0
      %895 = vmatpush2.msra.mxu0 0.0
      %896 = vmatprep.subr.mxu0 0.0
      %897 = vmatpush2.msra.mxu0 0.0
      %898 = vmatprep.subr.mxu0 0.0
      %899 = vmatpush2.msra.mxu0 0.0
      %900 = vmatprep.subr.mxu0 0.0
      %901 = vmatpush2.msra.mxu0 0.0
      %902 = vmatprep.subr.mxu0 0.0
      %903 = vmatpush2.msra.mxu0 0.0
      %904 = vmatprep.subr.mxu0 0.0
      %905 = vmatpush2.msra.mxu0 0.0
      %906 = vmatprep.subr.mxu0 0.0
      %907 = vmatpush2.msra.mxu0 0.0
      %908 = vmatprep.subr.mxu0 0.0
      %909 = vmatpush2.msra.mxu0 0.0
      %910 = vmatprep.subr.mxu0 0.0
      %911 = vmatpush2.msra.mxu0 0.0
      %912 = vmatprep.subr.mxu0 0.0
      %913 = vmatpush2.msra.mxu0 0.0
      %914 = vmatprep.subr.mxu0 0.0
      %915 = vmatpush2.msra.mxu0 0.0
      %916 = vmatprep.subr.mxu0 0.0
      %917 = vmatpush2.msra.mxu0 0.0
      %918 = vmatprep.mubr.f32.mxu0 0.0
      %v919 = vand.u32 %v111, 4294901760
      %v920 = vsub.f32 %v111, %v919
      %921 = vmatmul.mubr.f32.gmra.mxu0 %v920
      %v922 = vpop.f32.mrf.mxu0
      %v923 = vadd.f32 %v835, %v922
      %v924 = vpop.f32.mrf.mxu0
      %v925 = vadd.f32 %v837, %v924
      %926 = vmatprep.mubr.f32.mxu0 0.0
      %v927 = vand.u32 %v114, 4294901760
      %v928 = vsub.f32 %v114, %v927
      %929 = vmatmul.mubr.f32.gmra.mxu0 %v928
      %v930 = vpop.f32.mrf.mxu0
      %v931 = vadd.f32 %v842, %v930
      %v932 = vpop.f32.mrf.mxu0
      %v933 = vadd.f32 %v844, %v932
      %934 = vdwg.mxu0
      %935 = vmatprep.subr.mxu0 0.0
      %936 = vmatpush1.msra.mxu0 0.0
      %937 = vmatprep.subr.mxu0 0.0
      %938 = vmatpush1.msra.mxu0 0.0
      %939 = vmatprep.subr.mxu0 0.0
      %940 = vmatpush1.msra.mxu0 0.0
      %941 = vmatprep.subr.mxu0 0.0
      %942 = vmatpush1.msra.mxu0 0.0
      %943 = vmatprep.subr.mxu0 0.0
      %944 = vmatpush1.msra.mxu0 0.0
      %945 = vmatprep.subr.mxu0 0.0
      %946 = vmatpush1.msra.mxu0 0.0
      %947 = vmatprep.subr.mxu0 0.0
      %948 = vmatpush1.msra.mxu0 0.0
      %949 = vmatprep.subr.mxu0 0.0
      %950 = vmatpush1.msra.mxu0 0.0
      %951 = vmatprep.subr.mxu0 0.0
      %952 = vmatpush1.msra.mxu0 0.0
      %953 = vmatprep.subr.mxu0 0.0
      %954 = vmatpush1.msra.mxu0 0.0
      %955 = vmatprep.subr.mxu0 0.0
      %956 = vmatpush1.msra.mxu0 0.0
      %957 = vmatprep.subr.mxu0 0.0
      %958 = vmatpush1.msra.mxu0 0.0
      %959 = vmatprep.subr.mxu0 0.0
      %960 = vmatpush1.msra.mxu0 0.0
      %961 = vmatprep.subr.mxu0 0.0
      %962 = vmatpush1.msra.mxu0 0.0
      %v963 = vand.u32 %v108, 4294901760
      %964 = vmatprep.subr.mxu0 %v963
      %v965 = vand.u32 %v107, 4294901760
      %966 = vmatpush1.msra.mxu0 %v965
      %v967 = vand.u32 %v104, 4294901760
      %968 = vmatprep.subr.mxu0 %v967
      %v969 = vand.u32 %v103, 4294901760
      %970 = vmatpush1.msra.mxu0 %v969
      %971 = vmatprep.subr.mxu0 0.0
      %972 = vmatpush2.msra.mxu0 0.0
      %973 = vmatprep.subr.mxu0 0.0
      %974 = vmatpush2.msra.mxu0 0.0
      %975 = vmatprep.subr.mxu0 0.0
      %976 = vmatpush2.msra.mxu0 0.0
      %977 = vmatprep.subr.mxu0 0.0
      %978 = vmatpush2.msra.mxu0 0.0
      %979 = vmatprep.subr.mxu0 0.0
      %980 = vmatpush2.msra.mxu0 0.0
      %981 = vmatprep.subr.mxu0 0.0
      %982 = vmatpush2.msra.mxu0 0.0
      %983 = vmatprep.subr.mxu0 0.0
      %984 = vmatpush2.msra.mxu0 0.0
      %985 = vmatprep.subr.mxu0 0.0
      %986 = vmatpush2.msra.mxu0 0.0
      %987 = vmatprep.subr.mxu0 0.0
      %988 = vmatpush2.msra.mxu0 0.0
      %989 = vmatprep.subr.mxu0 0.0
      %990 = vmatpush2.msra.mxu0 0.0
      %991 = vmatprep.subr.mxu0 0.0
      %992 = vmatpush2.msra.mxu0 0.0
      %993 = vmatprep.subr.mxu0 0.0
      %994 = vmatpush2.msra.mxu0 0.0
      %995 = vmatprep.subr.mxu0 0.0
      %996 = vmatpush2.msra.mxu0 0.0
      %997 = vmatprep.subr.mxu0 0.0
      %998 = vmatpush2.msra.mxu0 0.0
      %999 = vmatprep.subr.mxu0 0.0
      %1000 = vmatpush2.msra.mxu0 0.0
      %1001 = vmatprep.subr.mxu0 0.0
      %1002 = vmatpush2.msra.mxu0 0.0
      %1003 = vmatprep.mubr.f32.mxu0 0.0
      %v1004 = vand.u32 %v111, 4294901760
      %v1005 = vsub.f32 %v111, %v1004
      %v1006 = vand.u32 %v1005, 4294901760
      %1007 = vmatmul.mubr.f32.gmra.mxu0 %v1006
      %v1008 = vpop.f32.mrf.mxu0
      %v1009 = vadd.f32 %v923, %v1008
      %v1010 = vpop.f32.mrf.mxu0
      %v1011 = vadd.f32 %v925, %v1010
      %1012 = vmatprep.mubr.f32.mxu0 0.0
      %v1013 = vand.u32 %v114, 4294901760
      %v1014 = vsub.f32 %v114, %v1013
      %v1015 = vand.u32 %v1014, 4294901760
      %1016 = vmatmul.mubr.f32.gmra.mxu0 %v1015
      %v1017 = vpop.f32.mrf.mxu0
      %v1018 = vadd.f32 %v931, %v1017
      %v1019 = vpop.f32.mrf.mxu0
      %v1020 = vadd.f32 %v933, %v1019
      %1021 = vdwg.mxu0
      %1022 = vmatprep.subr.mxu0 0.0
      %1023 = vmatpush1.msra.mxu0 0.0
      %1024 = vmatprep.subr.mxu0 0.0
      %1025 = vmatpush1.msra.mxu0 0.0
      %1026 = vmatprep.subr.mxu0 0.0
      %1027 = vmatpush1.msra.mxu0 0.0
      %1028 = vmatprep.subr.mxu0 0.0
      %1029 = vmatpush1.msra.mxu0 0.0
      %1030 = vmatprep.subr.mxu0 0.0
      %1031 = vmatpush1.msra.mxu0 0.0
      %1032 = vmatprep.subr.mxu0 0.0
      %1033 = vmatpush1.msra.mxu0 0.0
      %1034 = vmatprep.subr.mxu0 0.0
      %1035 = vmatpush1.msra.mxu0 0.0
      %1036 = vmatprep.subr.mxu0 0.0
      %1037 = vmatpush1.msra.mxu0 0.0
      %1038 = vmatprep.subr.mxu0 0.0
      %1039 = vmatpush1.msra.mxu0 0.0
      %1040 = vmatprep.subr.mxu0 0.0
      %1041 = vmatpush1.msra.mxu0 0.0
      %1042 = vmatprep.subr.mxu0 0.0
      %1043 = vmatpush1.msra.mxu0 0.0
      %1044 = vmatprep.subr.mxu0 0.0
      %1045 = vmatpush1.msra.mxu0 0.0
      %1046 = vmatprep.subr.mxu0 0.0
      %1047 = vmatpush1.msra.mxu0 0.0
      %1048 = vmatprep.subr.mxu0 0.0
      %1049 = vmatpush1.msra.mxu0 0.0
      %v1050 = vand.u32 %v108, 4294901760
      %v1051 = vsub.f32 %v108, %v1050
      %v1052 = vand.u32 %v1051, 4294901760
      %1053 = vmatprep.subr.mxu0 %v1052
      %v1054 = vand.u32 %v107, 4294901760
      %v1055 = vsub.f32 %v107, %v1054
      %v1056 = vand.u32 %v1055, 4294901760
      %1057 = vmatpush1.msra.mxu0 %v1056
      %v1058 = vand.u32 %v104, 4294901760
      %v1059 = vsub.f32 %v104, %v1058
      %v1060 = vand.u32 %v1059, 4294901760
      %1061 = vmatprep.subr.mxu0 %v1060
      %v1062 = vand.u32 %v103, 4294901760
      %v1063 = vsub.f32 %v103, %v1062
      %v1064 = vand.u32 %v1063, 4294901760
      %1065 = vmatpush1.msra.mxu0 %v1064
      %1066 = vmatprep.subr.mxu0 0.0
      %1067 = vmatpush2.msra.mxu0 0.0
      %1068 = vmatprep.subr.mxu0 0.0
      %1069 = vmatpush2.msra.mxu0 0.0
      %1070 = vmatprep.subr.mxu0 0.0
      %1071 = vmatpush2.msra.mxu0 0.0
      %1072 = vmatprep.subr.mxu0 0.0
      %1073 = vmatpush2.msra.mxu0 0.0
      %1074 = vmatprep.subr.mxu0 0.0
      %1075 = vmatpush2.msra.mxu0 0.0
      %1076 = vmatprep.subr.mxu0 0.0
      %1077 = vmatpush2.msra.mxu0 0.0
      %1078 = vmatprep.subr.mxu0 0.0
      %1079 = vmatpush2.msra.mxu0 0.0
      %1080 = vmatprep.subr.mxu0 0.0
      %1081 = vmatpush2.msra.mxu0 0.0
      %1082 = vmatprep.subr.mxu0 0.0
      %1083 = vmatpush2.msra.mxu0 0.0
      %1084 = vmatprep.subr.mxu0 0.0
      %1085 = vmatpush2.msra.mxu0 0.0
      %1086 = vmatprep.subr.mxu0 0.0
      %1087 = vmatpush2.msra.mxu0 0.0
      %1088 = vmatprep.subr.mxu0 0.0
      %1089 = vmatpush2.msra.mxu0 0.0
      %1090 = vmatprep.subr.mxu0 0.0
      %1091 = vmatpush2.msra.mxu0 0.0
      %1092 = vmatprep.subr.mxu0 0.0
      %1093 = vmatpush2.msra.mxu0 0.0
      %1094 = vmatprep.subr.mxu0 0.0
      %1095 = vmatpush2.msra.mxu0 0.0
      %1096 = vmatprep.subr.mxu0 0.0
      %1097 = vmatpush2.msra.mxu0 0.0
      %1098 = vmatprep.mubr.f32.mxu0 0.0
      %v1099 = vand.u32 %v111, 4294901760
      %1100 = vmatmul.mubr.f32.gmra.mxu0 %v1099
      %v1101 = vpop.f32.mrf.mxu0
      %v1102 = vadd.f32 %v1009, %v1101
      %v1103 = vpop.f32.mrf.mxu0
      %v1104 = vadd.f32 %v1011, %v1103
      %1105 = vmatprep.mubr.f32.mxu0 0.0
      %v1106 = vand.u32 %v114, 4294901760
      %1107 = vmatmul.mubr.f32.gmra.mxu0 %v1106
      %v1108 = vpop.f32.mrf.mxu0
      %v1109 = vadd.f32 %v1018, %v1108
      %v1110 = vpop.f32.mrf.mxu0
      %v1111 = vadd.f32 %v1020, %v1110
      %1112 = vdwg.mxu0
      %1113 = vmatprep.subr.mxu0 0.0
      %1114 = vmatpush1.msra.mxu0 0.0
      %1115 = vmatprep.subr.mxu0 0.0
      %1116 = vmatpush1.msra.mxu0 0.0
      %1117 = vmatprep.subr.mxu0 0.0
      %1118 = vmatpush1.msra.mxu0 0.0
      %1119 = vmatprep.subr.mxu0 0.0
      %1120 = vmatpush1.msra.mxu0 0.0
      %1121 = vmatprep.subr.mxu0 0.0
      %1122 = vmatpush1.msra.mxu0 0.0
      %1123 = vmatprep.subr.mxu0 0.0
      %1124 = vmatpush1.msra.mxu0 0.0
      %1125 = vmatprep.subr.mxu0 0.0
      %1126 = vmatpush1.msra.mxu0 0.0
      %1127 = vmatprep.subr.mxu0 0.0
      %1128 = vmatpush1.msra.mxu0 0.0
      %1129 = vmatprep.subr.mxu0 0.0
      %1130 = vmatpush1.msra.mxu0 0.0
      %1131 = vmatprep.subr.mxu0 0.0
      %1132 = vmatpush1.msra.mxu0 0.0
      %1133 = vmatprep.subr.mxu0 0.0
      %1134 = vmatpush1.msra.mxu0 0.0
      %1135 = vmatprep.subr.mxu0 0.0
      %1136 = vmatpush1.msra.mxu0 0.0
      %1137 = vmatprep.subr.mxu0 0.0
      %1138 = vmatpush1.msra.mxu0 0.0
      %1139 = vmatprep.subr.mxu0 0.0
      %1140 = vmatpush1.msra.mxu0 0.0
      %v1141 = vand.u32 %v108, 4294901760
      %1142 = vmatprep.subr.mxu0 %v1141
      %v1143 = vand.u32 %v107, 4294901760
      %1144 = vmatpush1.msra.mxu0 %v1143
      %v1145 = vand.u32 %v104, 4294901760
      %1146 = vmatprep.subr.mxu0 %v1145
      %v1147 = vand.u32 %v103, 4294901760
      %1148 = vmatpush1.msra.mxu0 %v1147
      %1149 = vmatprep.subr.mxu0 0.0
      %1150 = vmatpush2.msra.mxu0 0.0
      %1151 = vmatprep.subr.mxu0 0.0
      %1152 = vmatpush2.msra.mxu0 0.0
      %1153 = vmatprep.subr.mxu0 0.0
      %1154 = vmatpush2.msra.mxu0 0.0
      %1155 = vmatprep.subr.mxu0 0.0
      %1156 = vmatpush2.msra.mxu0 0.0
      %1157 = vmatprep.subr.mxu0 0.0
      %1158 = vmatpush2.msra.mxu0 0.0
      %1159 = vmatprep.subr.mxu0 0.0
      %1160 = vmatpush2.msra.mxu0 0.0
      %1161 = vmatprep.subr.mxu0 0.0
      %1162 = vmatpush2.msra.mxu0 0.0
      %1163 = vmatprep.subr.mxu0 0.0
      %1164 = vmatpush2.msra.mxu0 0.0
      %1165 = vmatprep.subr.mxu0 0.0
      %1166 = vmatpush2.msra.mxu0 0.0
      %1167 = vmatprep.subr.mxu0 0.0
      %1168 = vmatpush2.msra.mxu0 0.0
      %1169 = vmatprep.subr.mxu0 0.0
      %1170 = vmatpush2.msra.mxu0 0.0
      %1171 = vmatprep.subr.mxu0 0.0
      %1172 = vmatpush2.msra.mxu0 0.0
      %1173 = vmatprep.subr.mxu0 0.0
      %1174 = vmatpush2.msra.mxu0 0.0
      %1175 = vmatprep.subr.mxu0 0.0
      %1176 = vmatpush2.msra.mxu0 0.0
      %1177 = vmatprep.subr.mxu0 0.0
      %1178 = vmatpush2.msra.mxu0 0.0
      %1179 = vmatprep.subr.mxu0 0.0
      %1180 = vmatpush2.msra.mxu0 0.0
      %1181 = vmatprep.mubr.f32.mxu0 0.0
      %v1182 = vand.u32 %v111, 4294901760
      %1183 = vmatmul.mubr.f32.gmra.mxu0 %v1182
      %v1184 = vpop.f32.mrf.mxu0
      %v1185 = vadd.f32 %v1102, %v1184
      %v1186 = vpop.f32.mrf.mxu0
      %v1187 = vadd.f32 %v1104, %v1186
      %1188 = vmatprep.mubr.f32.mxu0 0.0
      %v1189 = vand.u32 %v114, 4294901760
      %1190 = vmatmul.mubr.f32.gmra.mxu0 %v1189
      %v1191 = vpop.f32.mrf.mxu0
      %v1192 = vadd.f32 %v1109, %v1191
      %v1193 = vpop.f32.mrf.mxu0
      %v1194 = vadd.f32 %v1111, %v1193
      %1195 = vdwg.mxu0
      %v1196 = vmax.f32 %v645, 0.0
      %v1197 = vmax.f32 %v647, 0.0
      %v1198 = vmax.f32 %v1185, 0.0
      %v1199 = vmax.f32 %v1187, 0.0
      %v1200 = vmax.f32 %v652, 0.0
      %v1201 = vmax.f32 %v654, 0.0
      %v1202 = vmax.f32 %v1192, 0.0
      %v1203 = vmax.f32 %v1194, 0.0
      %1205 = vset.pattern.permute.xlu0 0
      %1206 = vperm.xlu0 %1205, %v27
      %v1207 = vpop.permute.xlu0 %1206
      %1210 = vset.pattern.permute.xlu0 0
      %1211 = vperm.xlu0 %1210, %v28
      %v1212 = vpop.permute.xlu0 %1211
      %v1214 = vmul.f32 %v1196, %v1207
      %v1215 = vmul.f32 %v1197, %v1207
      %v1216 = vmul.f32 %v1198, %v1207
      %v1217 = vmul.f32 %v1199, %v1207
      %v1218 = vmul.f32 %v1200, %v1212
      %v1219 = vmul.f32 %v1201, %v1212
      %v1220 = vmul.f32 %v1202, %v1212
      %v1221 = vmul.f32 %v1203, %v1212
      %v1222 = vadd.f32 %v1214, %v1218
      %v1223 = vrot.slane %v1222, 4
      %v1224 = vadd.f32 %v1222, %v1223
      %v1225 = vrot.slane %v1224, 2
      %v1226 = vadd.f32 %v1224, %v1225
      %v1227 = vrot.slane %v1226, 1
      %v1228 = vadd.f32 %v1226, %v1227
      %v1229 = vadd.f32 %v1215, %v1219
      %v1230 = vrot.slane %v1229, 4
      %v1231 = vadd.f32 %v1229, %v1230
      %v1232 = vrot.slane %v1231, 2
      %v1233 = vadd.f32 %v1231, %v1232
      %v1234 = vrot.slane %v1233, 1
      %v1235 = vadd.f32 %v1233, %v1234
      %v1236 = vadd.f32 %v1216, %v1220
      %v1237 = vrot.slane %v1236, 4
      %v1238 = vadd.f32 %v1236, %v1237
      %v1239 = vrot.slane %v1238, 2
      %v1240 = vadd.f32 %v1238, %v1239
      %v1241 = vrot.slane %v1240, 1
      %v1242 = vadd.f32 %v1240, %v1241
      %v1243 = vadd.f32 %v1217, %v1221
      %v1244 = vrot.slane %v1243, 4
      %v1245 = vadd.f32 %v1243, %v1244
      %v1246 = vrot.slane %v1245, 2
      %v1247 = vadd.f32 %v1245, %v1246
      %v1248 = vrot.slane %v1247, 1
      %v1249 = vadd.f32 %v1247, %v1248
      %v1254 = vcombine.low %v1228, %v1235
      %v1255 = vcombine.low %v1242, %v1249
      %v1257 = vunpack.c.l.s4 1966171168
      %v1258 = vunpack.c.0.s8 %v1257
      %v1259 = vlaneseq
      %v1260 = vshrl.u32 %v1259, 7
      %v1261 = vsub.s32 %v1258, %v1260
      %v1262 = vrot.slane %v1254, %v1261
      %v1264 = vunpack.c.l.s4 1966171168
      %v1265 = vunpack.c.0.s8 %v1264
      %v1266 = vlaneseq
      %v1267 = vshrl.u32 %v1266, 7
      %v1268 = vsub.s32 %v1265, %v1267
      %v1269 = vrot.slane %v1255, %v1268
      %v1270 = vcombine.low %v1262, %v1269
      %v1272 = vunpack.c.l.s4 1966171168
      %v1273 = vunpack.c.0.s8 %v1272
      %v1274 = vlaneseq
      %v1275 = vshrl.u32 %v1274, 7
      %v1276 = vsub.s32 %v1273, %v1275
      %v1277 = vrot.slane %v1270, %v1276
      %v1279 = vlaneseq
      %vm1280 = vcmp.ge.s32.totalorder %v1279, 0
      %vm1281 = vcmp.lt.s32.totalorder %v1279, 512
      %vm1282 = vmand %vm1280, %vm1281
      %s1283 = scalar_lea.vmem [#allocation2], %s41
      %1284 = vst.msk [vmem:[%s1283] ss:$8 sm:$0xf] %vm1282, %v1277
      %1285 = vst.msk [vmem:[%s1283] ss:$8 sm:$0x0] %vm1282, %v1277
    $region26: #{tpu_custom_call.1} parent=1 // loop_footer
      %s34 = sadd.s32 1, %s30
    $region27: #{tpu_custom_call.1} parent=1 // loop_footer_branch
      %29 = sbr.rel target = $region23
    $region28: #{tpu_custom_call.1} parent=1 // loop_exit
      _
    // Predicated region
    $region29: #{tpu_custom_call.1} parent=1 // pred_check
      _
    $region30: #{tpu_custom_call.1} parent=1 // pred_check_branch
      %1287 = sbr.rel (0) target = $region32
    $region31: #{tpu_custom_call.1} parent=1 // pred_region
      %s1289 = ssub.s32 512, 512
      %1290 = vsyncadd [#allocation3], %s1289
      %s1292 = sshll.u32 [#allocation2], 4
      %s1293 = int_to_ptr.vmem [resolvable:$true] %s1292
      %1295 = dma.vmem_to_hbm [thread:$0]  %s1293, 512, %s5, [#allocation3]
    $region32: #{tpu_custom_call.1} parent=1 // pred_fallthru
      _
    // Predicated region
    $region33: #{tpu_custom_call.1} parent=1 // pred_check
      _
    $region34: #{tpu_custom_call.1} parent=1 // pred_check_branch
      %1297 = sbr.rel (0) target = $region36
    $region35: #{tpu_custom_call.1} parent=1 // pred_region
      %1298 = dma.done [#allocation3], 512
    $region36: #{tpu_custom_call.1} parent=1 // pred_fallthru
      _
    %1299 = vsyncpa [#allocation3], 1

</llo_original>
